<compile_context>
chip_gen: v5e
topology: v5e:2x2
jax: 0.10.0
libtpu: 0.0.40
codegen_flags: <defaults>
</compile_context>

<pallas_src>
import functools

import jax
import jax.numpy as jnp
from jax import lax
from jax.experimental import pallas as pl
from jax.experimental.pallas import tpu as pltpu


def _round_up(x, m):
    return ((x + m - 1) // m) * m


# ----------------------------------------------------------------------------
# Generic tiled matmul + bias kernel:  out = x @ w + b   (f32 accumulate/out)
# Used for (a) folding the input projection into the embedding table and
# (b) the final FC layer.  Grid order = (cols outer, rows inner) so each
# weight tile is DMA'd once (weights are the big operand when C = vocab) and
# only the small activation tile re-streams.
# ----------------------------------------------------------------------------
def _matmul_bias_kernel(x_ref, w_ref, b_ref, o_ref):
    o_ref[...] = (
        jnp.dot(x_ref[...], w_ref[...], preferred_element_type=jnp.float32)
        + b_ref[...]
    ).astype(o_ref.dtype)


def matmul_bias_pallas(x, w, b, *, tm=256, tn=256):
    """x: (R, K), w: (K, C), b: (C,) -> (R, C) f32.

    C must be a multiple of 128 at call sites; K is kept whole (small here —
    add an 'arbitrary' K axis for large K).  Tile sizes fit v5e's 16 MiB
    default scoped VMEM even in f32 (2x2x(256*K + K*256)*4B + out tile).
    """
    R, K = x.shape
    K2, C = w.shape
    assert K == K2
    tm = min(tm, R)
    tn = min(tn, C)
    grid = (pl.cdiv(C, tn), pl.cdiv(R, tm))  # j (cols) outer, i (rows) inner
    b2 = b.reshape(1, C).astype(jnp.float32)
    return pl.pallas_call(
        _matmul_bias_kernel,
        out_shape=jax.ShapeDtypeStruct((R, C), jnp.float32),
        grid_spec=pltpu.PrefetchScalarGridSpec(
            num_scalar_prefetch=0,
            grid=grid,
            in_specs=[
                pl.BlockSpec((tm, K), lambda j, i: (i, 0)),
                pl.BlockSpec((K, tn), lambda j, i: (0, j)),   # resident over inner i
                pl.BlockSpec((1, tn), lambda j, i: (0, j)),   # resident over inner i
            ],
            out_specs=pl.BlockSpec((tm, tn), lambda j, i: (i, j)),
        ),
        compiler_params=pltpu.CompilerParams(
            dimension_semantics=("parallel", "parallel"),
        ),
    )(x, w, b2)


# ----------------------------------------------------------------------------
# LSTM recurrence kernel with fused embedding gather.
#   grid = (n_batch_blocks [parallel], n_time_chunks [arbitrary, serial])
#   ids_ref   : SMEM (scalar prefetch) flattened (N_pad*BP,) token ids
#   table_ref : HBM (pl.ANY) folded xproj table (V, 4*HP)
#   whh_ref   : VMEM-resident (HP, 4*HP) recurrent weight (constant index map)
#   out_ref   : (T_CHUNK, BBLK, HP) output block per grid step
#   xbuf/sem  : double-buffered gather target + DMA semaphores
#   h_sc/c_sc : f32 carry, persists across time chunks
# ----------------------------------------------------------------------------
def _lstm_recurrence_kernel(ids_ref, table_ref, whh_ref, out_ref,
                            xbuf, sem, h_sc, c_sc, *, bp):
    bblk_idx = pl.program_id(0)          # batch block (parallel)
    chunk = pl.program_id(1)             # time chunk  (serial)
    n_chunks = pl.num_programs(1)

    t_chunk, bblk, hp = out_ref.shape
    slot = chunk % 2

    def fetch_chunk(c, dst_slot):
        # Gather t_chunk*bblk rows of the folded xproj table (HBM -> VMEM).
        for t in range(t_chunk):
            for b in range(bblk):
                row = ids_ref[(c * t_chunk + t) * bp + bblk_idx * bblk + b]
                pltpu.make_async_copy(
                    table_ref.at[pl.ds(row, 1), :],
                    xbuf.at[dst_slot, pl.ds(t * bblk + b, 1), :],
                    sem.at[dst_slot],
                ).start()

    def wait_chunk(dst_slot):
        # One wait per issued row copy (identical transfer size).
        for _ in range(t_chunk * bblk):
            pltpu.make_async_copy(
                table_ref.at[pl.ds(0, 1), :],
                xbuf.at[dst_slot, pl.ds(0, 1), :],
                sem.at[dst_slot],
            ).wait()

    @pl.when(chunk == 0)
    def _():
        # Reset carry and issue the (un-overlapped) prologue fetch for this
        # batch block.
        h_sc[...] = jnp.zeros_like(h_sc)
        c_sc[...] = jnp.zeros_like(c_sc)
        fetch_chunk(chunk, slot)

    wait_chunk(slot)

    @pl.when(chunk + 1 < n_chunks)
    def _():
        # Prefetch next chunk's rows into the other buffer while we compute.
        fetch_chunk(chunk + 1, 1 - slot)

    # TODO(synk): W_hh is re-pushed to the MXU every step; drive it explicitly
    # with pltpu.matmul_push_rhs/matmul_acc_lhs once per chunk if the bundle
    # dump shows the push on the serial critical path.
    def step(t, carry):
        h, c = carry
        start = pl.multiple_of(t * bblk, bblk)
        x_t = xbuf[slot, pl.ds(start, bblk), :].astype(jnp.float32)
        gates = x_t + jnp.dot(
            h.astype(whh_ref.dtype), whh_ref[...],
            preferred_element_type=jnp.float32,
        )  # (BBLK, 4*HP) f32
        i_g = jax.nn.sigmoid(gates[:, 0 * hp:1 * hp])
        f_g = jax.nn.sigmoid(gates[:, 1 * hp:2 * hp])
        g_g = jnp.tanh(gates[:, 2 * hp:3 * hp])
        o_g = jax.nn.sigmoid(gates[:, 3 * hp:4 * hp])
        c_new = f_g * c + i_g * g_g
        h_new = o_g * jnp.tanh(c_new)
        out_ref[t] = h_new.astype(out_ref.dtype)   # lane-dense (BBLK, HP) store
        return (h_new, c_new)

    h, c = lax.fori_loop(0, t_chunk, step, (h_sc[...], c_sc[...]), unroll=2)
    h_sc[...] = h
    c_sc[...] = c


def lstm_recurrence_pallas(ids_flat, xproj_table, whh_p, *,
                           n_pad, bp, t_chunk, n_bblk, out_dtype):
    """ids_flat: (n_pad*bp,) i32; xproj_table: (V, 4*HP); whh_p: (HP, 4*HP).

    Returns (n_pad, bp, HP) hidden states in `out_dtype`.
    """
    HP, G = whh_p.shape
    assert n_pad % t_chunk == 0 and bp % n_bblk == 0
    n_chunks = n_pad // t_chunk
    bblk = bp // n_bblk

    itm = jnp.dtype(xproj_table.dtype).itemsize
    out_itm = jnp.dtype(out_dtype).itemsize
    # VMEM budget: gather double-buffer + (possibly double-buffered) whh +
    # pipelined out blocks + f32 carries + gate temps; 2x headroom, clamped so
    # it is valid on v5e (>=16 MiB default) and below v7x's 64 MiB physical.
    est = (2 * t_chunk * bblk * G * itm
           + 2 * HP * G * itm
           + 2 * t_chunk * bblk * HP * out_itm
           + 2 * bblk * HP * 4
           + 8 * bblk * G * 4)
    vmem_limit = int(min(48 * 1024 * 1024, max(2 * est, 16 * 1024 * 1024)))

    kernel = functools.partial(_lstm_recurrence_kernel, bp=bp)
    return pl.pallas_call(
        kernel,
        out_shape=jax.ShapeDtypeStruct((n_pad, bp, HP), out_dtype),
        grid_spec=pltpu.PrefetchScalarGridSpec(
            num_scalar_prefetch=1,                 # ids -> SMEM
            grid=(n_bblk, n_chunks),
            in_specs=[
                pl.BlockSpec(memory_space=pl.ANY),               # table in HBM
                pl.BlockSpec((HP, G), lambda bb, c, ids: (0, 0)),  # resident
            ],
            out_specs=pl.BlockSpec((t_chunk, bblk, HP),
                                   lambda bb, c, ids: (c, bb, 0)),
            scratch_shapes=[
                pltpu.VMEM((2, t_chunk * bblk, G), xproj_table.dtype),  # xbuf
                pltpu.SemaphoreType.DMA((2,)),
                pltpu.VMEM((bblk, HP), jnp.float32),                    # h
                pltpu.VMEM((bblk, HP), jnp.float32),                    # c
            ],
        ),
        compiler_params=pltpu.CompilerParams(
            dimension_semantics=("parallel", "arbitrary"),
            vmem_limit_bytes=vmem_limit,
        ),
    )(ids_flat, xproj_table, whh_p)


# ----------------------------------------------------------------------------
# One-time parameter preparation: transpose, pad to lane/sublane-friendly
# shapes, fold the input projection + both biases into the embedding table,
# and cast the streamed weights/table to `param_dtype` (bf16 by default).
# Padded gate columns get zero weights/bias, so padded hidden units stay
# exactly zero through the recurrence.
# ----------------------------------------------------------------------------
def prepare_params(params, *, lane=128, param_dtype=jnp.bfloat16):
    embed = params["embed"].astype(jnp.float32)   # (V, M)
    w_ih = params["w_ih"].astype(jnp.float32)     # (4H, M)
    w_hh = params["w_hh"].astype(jnp.float32)     # (4H, H)
    bias = (params["b_ih"] + params["b_hh"]).astype(jnp.float32)  # (4H,)
    w_fc = params["w_fc"].astype(jnp.float32)     # (V, H)
    b_fc = params["b_fc"].astype(jnp.float32)     # (V,)

    V, M = embed.shape
    H = w_hh.shape[1]
    HP = _round_up(H, lane)
    VP = _round_up(V, lane)

    wih_t = w_ih.T   # (M, 4H)
    whh_t = w_hh.T   # (H, 4H)

    wih_p = jnp.zeros((M, 4 * HP), jnp.float32)
    whh_p = jnp.zeros((HP, 4 * HP), jnp.float32)
    bias_p = jnp.zeros((4 * HP,), jnp.float32)
    for g in range(4):  # PyTorch gate order i, f, g, o
        wih_p = wih_p.at[:, g * HP:g * HP + H].set(wih_t[:, g * H:(g + 1) * H])
        whh_p = whh_p.at[:H, g * HP:g * HP + H].set(whh_t[:, g * H:(g + 1) * H])
        bias_p = bias_p.at[g * HP:g * HP + H].set(bias[g * H:(g + 1) * H])

    # Fold the input projection + biases into the embedding: one f32 MXU matmul
    # up front; the recurrence then only gathers rows of this table from HBM.
    xproj_table = matmul_bias_pallas(embed, wih_p, bias_p).astype(param_dtype)

    wfc_p = (jnp.zeros((HP, VP), jnp.float32).at[:H, :V].set(w_fc.T)
             .astype(param_dtype))
    bfc_p = jnp.zeros((VP,), jnp.float32).at[:V].set(b_fc)

    return {
        "xproj_table": xproj_table,  # (V, 4*HP) param_dtype
        "whh_p": whh_p.astype(param_dtype),  # (HP, 4*HP)
        "wfc_p": wfc_p,              # (HP, VP) param_dtype
        "bfc_p": bfc_p,              # (VP,) f32
    }


# ----------------------------------------------------------------------------
# Full module forward
# ----------------------------------------------------------------------------
def lstm_module_forward(sentence, prep, *, t_chunk=8):
    """sentence: (N, B) int32. Returns logits (N, B, V) f32."""
    N, B = sentence.shape
    table = prep["xproj_table"]
    whh_p = prep["whh_p"]
    V = table.shape[0]
    HP = whh_p.shape[0]
    param_dtype = table.dtype

    BP = _round_up(max(B, 8), 8)          # pad batch to a sublane multiple
    n_bblk = 2 if BP >= 16 else 1         # megacore-parallel batch blocks (v7x)
    t_chunk = int(min(t_chunk, N))
    N_pad = _round_up(N, t_chunk)

    # Pad only the tiny int32 id array (padded rows/steps point at token 0 and
    # are sliced off); the big xproj slab is never materialized by XLA.
    sent_p = (jnp.zeros((N_pad, BP), jnp.int32)
              .at[:N, :B].set(sentence.astype(jnp.int32)))
    ids_flat = sent_p.reshape(-1)

    lstm_out_p = lstm_recurrence_pallas(
        ids_flat, table, whh_p,
        n_pad=N_pad, bp=BP, t_chunk=t_chunk, n_bblk=n_bblk,
        out_dtype=param_dtype)            # (N_pad, BP, HP)

    # TODO(synk): nn.Dropout(p=0.5) is identity in eval mode; stochastic
    # training-mode dropout is intentionally not applied here.

    # Slice time/batch padding off BEFORE the FC (avoids BP/B x wasted FLOPs
    # and HBM logit writes).
    lstm_out = lstm_out_p[:N, :B, :].reshape(N * B, HP)

    logits_p = matmul_bias_pallas(lstm_out, prep["wfc_p"], prep["bfc_p"])
    return logits_p.reshape(N, B, -1)[:, :, :V]


# ----------------------------------------------------------------------------
# Pure-JAX reference (sanity check for the Pallas kernels)
# ----------------------------------------------------------------------------
def reference_forward(sentence, params):
    embeds = jnp.take(params["embed"], sentence, axis=0)
    H = params["w_hh"].shape[1]
    B = sentence.shape[1]

    def step(carry, x_t):
        h, c = carry
        gates = (x_t @ params["w_ih"].T + params["b_ih"]
                 + h @ params["w_hh"].T + params["b_hh"])
        i = jax.nn.sigmoid(gates[:, 0 * H:1 * H])
        f = jax.nn.sigmoid(gates[:, 1 * H:2 * H])
        g = jnp.tanh(gates[:, 2 * H:3 * H])
        o = jax.nn.sigmoid(gates[:, 3 * H:4 * H])
        c = f * c + i * g
        h = o * jnp.tanh(c)
        return (h, c), h

    h0 = jnp.zeros((B, H), jnp.float32)
    c0 = jnp.zeros((B, H), jnp.float32)
    _, lstm_out = jax.lax.scan(step, (h0, c0), embeds)
    return lstm_out @ params["w_fc"].T + params["b_fc"]


def init_params(key, V, M, H):
    ks = jax.random.split(key, 7)
    k = 1.0 / jnp.sqrt(H)
    return {
        "embed": jax.random.normal(ks[0], (V, M), jnp.float32),
        "w_ih": jax.random.uniform(ks[1], (4 * H, M), jnp.float32, -k, k),
        "w_hh": jax.random.uniform(ks[2], (4 * H, H), jnp.float32, -k, k),
        "b_ih": jax.random.uniform(ks[3], (4 * H,), jnp.float32, -k, k),
        "b_hh": jax.random.uniform(ks[4], (4 * H,), jnp.float32, -k, k),
        "w_fc": jax.random.uniform(ks[5], (V, H), jnp.float32, -k, k),
        "b_fc": jax.random.uniform(ks[6], (V,), jnp.float32, -k, k),
    }


if __name__ == "__main__":
    # Small shapes consistent with the module's forward.
    V_vocab, M_embed, H_hidden, N_seq, B_batch = 64, 32, 32, 8, 2

    key = jax.random.PRNGKey(0)
    kp, kx = jax.random.split(key)
    params = init_params(kp, V_vocab, M_embed, H_hidden)
    sentence = jax.random.randint(kx, (N_seq, B_batch), 0, V_vocab, jnp.int32)

    ref = reference_forward(sentence, params)
    fwd = jax.jit(lstm_module_forward)

    # Float32 path: tight numerical check of the kernel structure.
    prep_f32 = prepare_params(params, param_dtype=jnp.float32)
    logits_f32 = jax.block_until_ready(fwd(sentence, prep_f32))
    assert logits_f32.shape == (N_seq, B_batch, V_vocab)
    err_f32 = jnp.max(jnp.abs(logits_f32 - ref))
    assert jnp.allclose(logits_f32, ref, atol=1e-4, rtol=1e-4), \
        f"f32 max abs err {err_f32}"

    # Default bfloat16 path (performance config): looser tolerance.
    prep_bf16 = prepare_params(params)  # param_dtype=bfloat16
    logits_bf16 = jax.block_until_ready(fwd(sentence, prep_bf16))
    assert logits_bf16.shape == (N_seq, B_batch, V_vocab)
    err_bf16 = jnp.max(jnp.abs(logits_bf16 - ref))
    assert jnp.allclose(logits_bf16, ref, atol=1e-1, rtol=1e-1), \
        f"bf16 max abs err {err_bf16}"

    print("KERNEL_OK")
</pallas_src>

<mosaic_0001>
module attributes {stable_mosaic.version = 11 : i64} {
  func.func @_matmul_bias_kernel(%arg0: i32, %arg1: i32, %arg2: memref<64x32xf32, #tpu.memory_space<vmem>>, %arg3: memref<32x256xf32, #tpu.memory_space<vmem>>, %arg4: memref<1x256xf32, #tpu.memory_space<vmem>>, %arg5: memref<64x256xf32, #tpu.memory_space<vmem>>) attributes {dimension_semantics = [#tpu.dimension_semantics<parallel>, #tpu.dimension_semantics<parallel>], iteration_bounds = array<i64: 2, 1>, scalar_prefetch = 0 : i64, scratch_operands = 0 : i64, tpu.core_type = #tpu.core_type<tc>, window_params = [{transform_indices = @transform_0, window_bounds = array<i64: 64, 32>}, {transform_indices = @transform_1, window_bounds = array<i64: 32, 256>}, {transform_indices = @transform_2, window_bounds = array<i64: 1, 256>}, {transform_indices = @transform_3, window_bounds = array<i64: 64, 256>}]} {
    %c0 = arith.constant 0 : index
    %c0_0 = arith.constant 0 : index
    %0 = vector.load %arg2[%c0, %c0_0] : memref<64x32xf32, #tpu.memory_space<vmem>>, vector<64x32xf32>
    %c0_1 = arith.constant 0 : index
    %c0_2 = arith.constant 0 : index
    %1 = vector.load %arg3[%c0_1, %c0_2] : memref<32x256xf32, #tpu.memory_space<vmem>>, vector<32x256xf32>
    %cst = arith.constant dense<0.000000e+00> : vector<64x256xf32>
    %2 = tpu.matmul %0, %1, %cst {dimension_numbers = #tpu.dot_dimension_numbers<[1], [0], [0], [1], [0, 0, 1, 1], [], []>} : vector<64x32xf32>, vector<32x256xf32>, vector<64x256xf32> -> vector<64x256xf32>
    %c0_3 = arith.constant 0 : index
    %c0_4 = arith.constant 0 : index
    %3 = vector.load %arg4[%c0_3, %c0_4] : memref<1x256xf32, #tpu.memory_space<vmem>>, vector<1x256xf32>
    %4 = vector.broadcast %3 : vector<1x256xf32> to vector<64x256xf32>
    %5 = arith.addf %2, %4 : vector<64x256xf32>
    %c0_5 = arith.constant 0 : index
    %c0_6 = arith.constant 0 : index
    %6 = vector.load %arg5[%c0_5, %c0_6] : memref<64x256xf32, #tpu.memory_space<vmem>>, vector<64x256xf32>
    tpu.vector_store %arg5[%c0_5, %c0_6], %5 {strides = array<i32>} : memref<64x256xf32, #tpu.memory_space<vmem>>, vector<64x256xf32>,
    return
  }
  func.func @transform_0(%arg0: i32, %arg1: i32) -> (i32, i32) {
    %c0_i32 = arith.constant 0 : i32
    %c0_i32_0 = arith.constant 0 : i32
    return %arg1, %c0_i32 : i32, i32
  }
  func.func @transform_1(%arg0: i32, %arg1: i32) -> (i32, i32) {
    %c0_i32 = arith.constant 0 : i32
    %c0_i32_0 = arith.constant 0 : i32
    return %c0_i32, %arg0 : i32, i32
  }
  func.func @transform_2(%arg0: i32, %arg1: i32) -> (i32, i32) {
    %c0_i32 = arith.constant 0 : i32
    %c0_i32_0 = arith.constant 0 : i32
    return %c0_i32, %arg0 : i32, i32
  }
  func.func @transform_3(%arg0: i32, %arg1: i32) -> (i32, i32) {
    %c0_i32 = arith.constant 0 : i32
    return %arg1, %arg0 : i32, i32
  }
}

</mosaic_0001>

<llo_original>
// kernel: tpu_custom_call.1
$region0: #{tpu_custom_call.1}
  #allocation0 [shape = 'u32[]', space=smem, size = 0x4, offset = 0x4, fixed_abs, tag = 'smem constant byte address 0x4 - core index']
  #allocation1 [shape = 'u32[72,128]{1,0:T(1,128)}', space=vmem, size = 0x9000, scoped, tag = 'internal scratch']
  %s0 = inlined_call_operand.vmem [shape: f32[64,32], index: 0, kind: input, shape index: {}]
  %s1 = inlined_call_operand.hbm [shape: f32[32,512], index: 1, kind: input, shape index: {}]
  %s2 = inlined_call_operand.vmem [shape: f32[1,512], index: 2, kind: input, shape index: {}]
  %s3 = inlined_call_operand.hbm [shape: f32[64,512], index: 3, kind: output, shape index: {}]
  %s4 = sld [smem:[#allocation0]]
  $region49: #{tpu_custom_call.1} parent=0
    _
  %s6 = ssub.s32 1, %s4
  %s7 = scalar_select 0, %s6, %s4
  $region1: #{tpu_custom_call.1} parent=0
    #allocation2 [shape = 'u8[65536]{0}', space=vmem, size = 0x10000, scoped, tag = 'input window, operand 1']
    #allocation3 [shape = 's32[2]{0}', space=sflag, size = 0x8, scoped, tag = 'scoped memory for tpu_custom_call.1']
    #allocation4 [shape = 's32[2]{0}', space=sflag, size = 0x8, scoped, tag = 'scoped memory for tpu_custom_call.1']
    #allocation5 [shape = 'u8[131072]{0}', space=vmem, size = 0x20000, scoped, tag = 'output window, operand 0']
    %8 = vsyncpa [#allocation3], 0
    %s9 = scalar_lea.sflag [#allocation3], 1
    %10 = vsyncpa %s9, 0
    %11 = vsyncpa [#allocation4], 0
    %s12 = scalar_lea.sflag [#allocation4], 1
    %13 = vsyncpa %s12, 0
    loop: start=0, step=1, limit=4
    $region2: #{tpu_custom_call.1} parent=1 // loop_pre_header
      _
    $region3: #{tpu_custom_call.1} parent=1 // loop_header
      %s15 = sphi 0, %s19
      %p16 = scmp.ge.s32.totalorder %s15, 4
      %s22 = sphi 0, %s34
      %s23 = sphi 0, %s30
      %s24 = sphi 0, %s22
      %s25 = sphi 0, %s23
      %s26 = sphi 0, %s24
      %s27 = sphi 0, %s25
      %s37 = sphi 0, %s39
      %s40 = sphi 0, %s37
      %s41 = sphi 0, %s40
      %s57 = sphi 0, %s41
      %s63 = sphi 0, %s65
      %s66 = sphi 0, %s63
      %s67 = sphi 0, %s66
      %s83 = sphi 0, %s67
      %s89 = sphi 0, %s91
      %s92 = sphi 0, %s89
      %s93 = sphi 0, %s92
      %s109 = sphi 0, %s93
      %s117 = sphi 0, %s119
      %s120 = sphi 0, %s117
      %s121 = sphi 0, %s120
      %s137 = sphi 0, %s121
    $region4: #{tpu_custom_call.1} parent=1 // loop_header_branch
      %18 = sbr.rel (%p16) target = $region8
    $region5: #{tpu_custom_call.1} parent=1 // loop_body
      %s20 = ssub.s32 %s15, 1
      %s21 = ssub.s32 %s15, 2
      %s28 = sadd.s32 1, %s23
      %p29 = scmp.ge.s32.totalorder %s28, 1
      %s30 = scalar_select %p29, 0, %s28
      %s31 = sadd.s32 1, %s22
      %s32 = scalar_select %p29, %s31, %s22
      %p33 = scmp.ge.s32.totalorder %s32, 2
      %s34 = scalar_select %p33, 0, %s32
      %s35 = ssub.s32 %s23, %s30
      %p36 = scmp.eq.s32.totalorder %s35, 0
      %s38 = sadd.s32 %s37, 1
      %s39 = scalar_select %p36, %s37, %s38
      %p42 = pneg %p36
      %p43 = scmp.eq.s32.totalorder %s15, 1
      %p44 = por %p42, %p43
      %p45 = scmp.ne.s32.totalorder %s37, %s40
      %p46 = scmp.eq.s32.totalorder %s15, 0
      %p47 = por %p45, %p46
      %p48 = scmp.ne.s32.totalorder %s37, %s40
      %p49 = scmp.eq.s32.totalorder %s20, 1
      %p50 = por %p48, %p49
      %p51 = scmp.ne.s32.totalorder %s40, %s41
      %p52 = scmp.eq.s32.totalorder %s20, 0
      %p53 = por %p51, %p52
      %p54 = scmp.ne.s32.totalorder %s40, %s41
      %p55 = scmp.eq.s32.totalorder %s21, 1
      %p56 = por %p54, %p55
      %p58 = scmp.ne.s32.totalorder %s41, %s57
      %p59 = scmp.eq.s32.totalorder %s21, 0
      %p60 = por %p58, %p59
      %s61 = ssub.s32 %s22, %s34
      %p62 = scmp.eq.s32.totalorder %s61, 0
      %s64 = sadd.s32 %s63, 1
      %s65 = scalar_select %p62, %s63, %s64
      %p68 = pneg %p62
      %p69 = scmp.eq.s32.totalorder %s15, 1
      %p70 = por %p68, %p69
      %p71 = scmp.ne.s32.totalorder %s63, %s66
      %p72 = scmp.eq.s32.totalorder %s15, 0
      %p73 = por %p71, %p72
      %p74 = scmp.ne.s32.totalorder %s63, %s66
      %p75 = scmp.eq.s32.totalorder %s20, 1
      %p76 = por %p74, %p75
      %p77 = scmp.ne.s32.totalorder %s66, %s67
      %p78 = scmp.eq.s32.totalorder %s20, 0
      %p79 = por %p77, %p78
      %p80 = scmp.ne.s32.totalorder %s66, %s67
      %p81 = scmp.eq.s32.totalorder %s21, 1
      %p82 = por %p80, %p81
      %p84 = scmp.ne.s32.totalorder %s67, %s83
      %p85 = scmp.eq.s32.totalorder %s21, 0
      %p86 = por %p84, %p85
      %s87 = ssub.s32 %s22, %s34
      %p88 = scmp.eq.s32.totalorder %s87, 0
      %s90 = sadd.s32 %s89, 1
      %s91 = scalar_select %p88, %s89, %s90
      %p94 = pneg %p88
      %p95 = scmp.eq.s32.totalorder %s15, 1
      %p96 = por %p94, %p95
      %p97 = scmp.ne.s32.totalorder %s89, %s92
      %p98 = scmp.eq.s32.totalorder %s15, 0
      %p99 = por %p97, %p98
      %p100 = scmp.ne.s32.totalorder %s89, %s92
      %p101 = scmp.eq.s32.totalorder %s20, 1
      %p102 = por %p100, %p101
      %p103 = scmp.ne.s32.totalorder %s92, %s93
      %p104 = scmp.eq.s32.totalorder %s20, 0
      %p105 = por %p103, %p104
      %p106 = scmp.ne.s32.totalorder %s92, %s93
      %p107 = scmp.eq.s32.totalorder %s21, 1
      %p108 = por %p106, %p107
      %p110 = scmp.ne.s32.totalorder %s93, %s109
      %p111 = scmp.eq.s32.totalorder %s21, 0
      %p112 = por %p110, %p111
      %s113 = ssub.s32 %s23, %s30
      %s114 = ssub.s32 %s22, %s34
      %s115 = sor.u32 %s113, %s114
      %p116 = scmp.eq.s32.totalorder %s115, 0
      %s118 = sadd.s32 %s117, 1
      %s119 = scalar_select %p116, %s117, %s118
      %p122 = pneg %p116
      %p123 = scmp.eq.s32.totalorder %s15, 1
      %p124 = por %p122, %p123
      %p125 = scmp.ne.s32.totalorder %s117, %s120
      %p126 = scmp.eq.s32.totalorder %s15, 0
      %p127 = por %p125, %p126
      %p128 = scmp.ne.s32.totalorder %s117, %s120
      %p129 = scmp.eq.s32.totalorder %s20, 1
      %p130 = por %p128, %p129
      %p131 = scmp.ne.s32.totalorder %s120, %s121
      %p132 = scmp.eq.s32.totalorder %s20, 0
      %p133 = por %p131, %p132
      %p134 = scmp.ne.s32.totalorder %s120, %s121
      %p135 = scmp.eq.s32.totalorder %s21, 1
      %p136 = por %p134, %p135
      %p138 = scmp.ne.s32.totalorder %s121, %s137
      %p139 = scmp.eq.s32.totalorder %s21, 0
      %p140 = por %p138, %p139
      %p141 = scmp.le.s32.totalorder 1, %s15
      %p142 = scmp.lt.s32.totalorder %s15, 3
      %p143 = pnand %p141, %p142
      %p144 = pneg %p143
      // Predicated region
      $region9: #{tpu_custom_call.1} parent=5 // pred_check
        _
      $region10: #{tpu_custom_call.1} parent=5 // pred_check_branch
        %146 = sbr.rel (%p143) target = $region12
      $region11: #{tpu_custom_call.1} parent=5 // pred_region
        %s147 = ssub.s32 %s15, 1
        // Predicated region
        $region13: #{tpu_custom_call.1} parent=11 // pred_check
          %p148 = pneg %p53
        $region14: #{tpu_custom_call.1} parent=11 // pred_check_branch
          %150 = sbr.rel (%p148) target = $region16
        $region15: #{tpu_custom_call.1} parent=11 // pred_region
          %s151 = smul.u32 8, %s25
          %p152 = scmp.lt.s32.totalorder %s151, 7
          %s153 = scalar_select %p152, %s151, 7
          %s154 = smul.addr %s153, 8
          %s155 = scalar_lea.vmem %s0, %s154
          %s156 = smul.u32 8, %s25
        $region16: #{tpu_custom_call.1} parent=11 // pred_fallthru
          _
      $region12: #{tpu_custom_call.1} parent=5 // pred_fallthru
        _
      %p157 = scmp.lt.s32.totalorder %s15, 2
      // Predicated region
      $region17: #{tpu_custom_call.1} parent=5 // pred_check
        %p158 = pneg %p157
      $region18: #{tpu_custom_call.1} parent=5 // pred_check_branch
        %160 = sbr.rel (%p158) target = $region20
      $region19: #{tpu_custom_call.1} parent=5 // pred_region
        // Predicated region
        $region21: #{tpu_custom_call.1} parent=19 // pred_check
          %p161 = pneg %p73
        $region22: #{tpu_custom_call.1} parent=19 // pred_check_branch
          %163 = sbr.rel (%p161) target = $region24
        $region23: #{tpu_custom_call.1} parent=19 // pred_region
          %s164 = sand.u32 %s63, 1
          %s165 = scalar_lea.sflag [#allocation3], %s164
          %s166 = sand.u32 %s63, 1
          %s167 = smul.addr %s166, 64
          %s168 = scalar_lea.vmem [#allocation2], %s167
          %s169 = smul.u32 2, %s22
          %171 = vsyncadd %s165, 0
          %s172 = smul.addr %s169, 8
          %s173 = scalar_lea.hbm %s1, %s172
          %s174 = sshll.u32 %s173, 4
          %s175 = int_to_ptr.hbm [resolvable:$true] %s174
          %s176 = sshll.u32 %s168, 4
          %s177 = int_to_ptr.vmem [resolvable:$true] %s176
          %182 = dma.hbm_to_vmem [thread:$0]  %s175, 1024, %s177, %s165, 512, 256, 16
        $region24: #{tpu_custom_call.1} parent=19 // pred_fallthru
          _
        // Predicated region
        $region25: #{tpu_custom_call.1} parent=19 // pred_check
          %p183 = pneg %p99
        $region26: #{tpu_custom_call.1} parent=19 // pred_check_branch
          %185 = sbr.rel (%p183) target = $region28
        $region27: #{tpu_custom_call.1} parent=19 // pred_region
          %s186 = smul.u32 2, %s22
          %p187 = scmp.lt.s32.totalorder %s186, 3
          %s188 = scalar_select %p187, %s186, 3
          %s189 = scalar_lea.vmem %s2, %s188
          %s190 = smul.u32 2, %s22
        $region28: #{tpu_custom_call.1} parent=19 // pred_fallthru
          _
      $region20: #{tpu_custom_call.1} parent=5 // pred_fallthru
        _
      %p191 = scmp.le.s32.totalorder 1, %s15
      %p192 = scmp.lt.s32.totalorder %s15, 3
      %p193 = pnand %p191, %p192
      %p194 = pneg %p193
      // Predicated region
      $region29: #{tpu_custom_call.1} parent=5 // pred_check
        _
      $region30: #{tpu_custom_call.1} parent=5 // pred_check_branch
        %196 = sbr.rel (%p193) target = $region32
      $region31: #{tpu_custom_call.1} parent=5 // pred_region
        %s197 = ssub.s32 %s15, 1
        %s198 = sand.u32 %s66, 1
        %s199 = scalar_lea.sflag [#allocation3], %s198
        %s200 = sand.u32 %s66, 1
        %s201 = smul.addr %s200, 64
        %s202 = scalar_lea.vmem [#allocation2], %s201
        // Predicated region
        $region33: #{tpu_custom_call.1} parent=31 // pred_check
          %p203 = pneg %p79
        $region34: #{tpu_custom_call.1} parent=31 // pred_check_branch
          %205 = sbr.rel (%p203) target = $region36
        $region35: #{tpu_custom_call.1} parent=31 // pred_region
          %207 = dma.done %s199, 1024
        $region36: #{tpu_custom_call.1} parent=31 // pred_fallthru
          _
        %s208 = smul.u32 8, %s25
        %p209 = scmp.lt.s32.totalorder %s208, 7
        %s210 = scalar_select %p209, %s208, 7
        %s211 = smul.addr %s210, 8
        %s212 = scalar_lea.vmem %s0, %s211
        %p213 = pneg %p53
        %p214 = pneg %p50
        %s215 = sand.u32 %s66, 1
        %s216 = scalar_lea.sflag [#allocation3], %s215
        %s217 = sand.u32 %s66, 1
        %s218 = smul.addr %s217, 64
        %s219 = scalar_lea.vmem [#allocation2], %s218
        %p220 = pneg %p79
        %p221 = pneg %p76
        %s222 = smul.u32 2, %s24
        %p223 = scmp.lt.s32.totalorder %s222, 3
        %s224 = scalar_select %p223, %s222, 3
        %s225 = scalar_lea.vmem %s2, %s224
        %p226 = pneg %p105
        %p227 = pneg %p102
        %p228 = pneg %p133
        %p229 = pneg %p130
        %s230 = sand.u32 %s120, 1
        %s231 = scalar_lea.sflag [#allocation4], %s230
        %s232 = sand.u32 %s120, 1
        %s233 = smul.addr %s232, 128
        %s234 = scalar_lea.vmem [#allocation5], %s233
        %s235 = smul.u32 8, %s25
        %p236 = scmp.lt.s32.totalorder %s235, 7
        %s237 = scalar_select %p236, %s235, 7
        %s238 = smul.addr %s237, 8
        %s239 = scalar_lea.vmem %s0, %s238
        %s240 = smul.u32 8, %s25
        %s241 = smul.u32 2, %s24
        %s242 = smul.u32 2, %s24
        %p243 = scmp.lt.s32.totalorder %s242, 3
        %s244 = scalar_select %p243, %s242, 3
        %s245 = scalar_lea.vmem %s2, %s244
        %s246 = smul.u32 2, %s24
        %s247 = smul.u32 8, %s25
        %s248 = smul.u32 2, %s24
        %v249 = vld [vmem:[%s239] sm:$0xff]
        %v250 = vld [vmem:[%s239 + $0x8] sm:$0xff]
        %v251 = vld [vmem:[%s239 + $0x10] sm:$0xff]
        %v252 = vld [vmem:[%s239 + $0x18] sm:$0xff]
        %v253 = vld [vmem:[%s239 + $0x20] sm:$0xff]
        %v254 = vld [vmem:[%s239 + $0x28] sm:$0xff]
        %v255 = vld [vmem:[%s239 + $0x30] sm:$0xff]
        %v256 = vld [vmem:[%s239 + $0x38] sm:$0xff]
        %v257 = vld [vmem:[%s202] sm:$0xff]
        %v258 = vld [vmem:[%s202 + $0x8] sm:$0xff]
        %v259 = vld [vmem:[%s202 + $0x10] sm:$0xff]
        %v260 = vld [vmem:[%s202 + $0x18] sm:$0xff]
        %v261 = vld [vmem:[%s202 + $0x20] sm:$0xff]
        %v262 = vld [vmem:[%s202 + $0x28] sm:$0xff]
        %v263 = vld [vmem:[%s202 + $0x30] sm:$0xff]
        %v264 = vld [vmem:[%s202 + $0x38] sm:$0xff]
        %v265 = vld [vmem:[%s245] sm:$0x3]
        %v267 = vperm.slane %v265, 0
        %v268 = vperm.slane %v265, 1
        %vm271 = vcmask 261120
        %v273 = vsel %vm271, %v249, 0
        %v276 = vsel %vm271, %v250, 0
        %v279 = vsel %vm271, %v251, 0
        %v282 = vsel %vm271, %v252, 0
        %v285 = vsel %vm271, %v253, 0
        %v288 = vsel %vm271, %v254, 0
        %v291 = vsel %vm271, %v255, 0
        %v294 = vsel %vm271, %v256, 0
        %296 = vmatpush.msra.mxu0 0.0
        %297 = vmatpush.msra.mxu0 0.0
        %298 = vmatpush.msra.mxu0 0.0
        %299 = vmatpush.msra.mxu0 0.0
        %300 = vmatpush.msra.mxu0 0.0
        %301 = vmatpush.msra.mxu0 0.0
        %302 = vmatpush.msra.mxu0 0.0
        %303 = vmatpush.msra.mxu0 0.0
        %304 = vmatpush.msra.mxu0 0.0
        %305 = vmatpush.msra.mxu0 0.0
        %306 = vmatpush.msra.mxu0 0.0
        %307 = vmatpush.msra.mxu0 0.0
        %308 = vmatpush.msra.mxu0 %v263
        %309 = vmatpush.msra.mxu0 %v261
        %310 = vmatpush.msra.mxu0 %v259
        %311 = vmatpush.msra.mxu0 %v257
        %312 = vmatmul.f32.gmra.mxu0 %v273
        %v313 = vpop.f32.mrf.mxu0
        %v314 = vadd.f32 %v267, %v313
        %315 = vmatmul.f32.gmra.mxu0 %v276
        %v316 = vpop.f32.mrf.mxu0
        %v317 = vadd.f32 %v267, %v316
        %318 = vmatmul.f32.gmra.mxu0 %v279
        %v319 = vpop.f32.mrf.mxu0
        %v320 = vadd.f32 %v267, %v319
        %321 = vmatmul.f32.gmra.mxu0 %v282
        %v322 = vpop.f32.mrf.mxu0
        %v323 = vadd.f32 %v267, %v322
        %324 = vmatmul.f32.gmra.mxu0 %v285
        %v325 = vpop.f32.mrf.mxu0
        %v326 = vadd.f32 %v267, %v325
        %327 = vmatmul.f32.gmra.mxu0 %v288
        %v328 = vpop.f32.mrf.mxu0
        %v329 = vadd.f32 %v267, %v328
        %330 = vmatmul.f32.gmra.mxu0 %v291
        %v331 = vpop.f32.mrf.mxu0
        %v332 = vadd.f32 %v267, %v331
        %333 = vmatmul.f32.gmra.mxu0 %v294
        %v334 = vpop.f32.mrf.mxu0
        %v335 = vadd.f32 %v267, %v334
        %336 = vdwg.mxu0
        %337 = vmatpush.msra.mxu0 0.0
        %338 = vmatpush.msra.mxu0 0.0
        %339 = vmatpush.msra.mxu0 0.0
        %340 = vmatpush.msra.mxu0 0.0
        %341 = vmatpush.msra.mxu0 0.0
        %342 = vmatpush.msra.mxu0 0.0
        %343 = vmatpush.msra.mxu0 0.0
        %344 = vmatpush.msra.mxu0 0.0
        %345 = vmatpush.msra.mxu0 0.0
        %346 = vmatpush.msra.mxu0 0.0
        %347 = vmatpush.msra.mxu0 0.0
        %348 = vmatpush.msra.mxu0 0.0
        %349 = vmatpush.msra.mxu0 %v264
        %350 = vmatpush.msra.mxu0 %v262
        %351 = vmatpush.msra.mxu0 %v260
        %352 = vmatpush.msra.mxu0 %v258
        %353 = vmatmul.f32.gmra.mxu0 %v273
        %v354 = vpop.f32.mrf.mxu0
        %v355 = vadd.f32 %v268, %v354
        %356 = vmatmul.f32.gmra.mxu0 %v276
        %v357 = vpop.f32.mrf.mxu0
        %v358 = vadd.f32 %v268, %v357
        %359 = vmatmul.f32.gmra.mxu0 %v279
        %v360 = vpop.f32.mrf.mxu0
        %v361 = vadd.f32 %v268, %v360
        %362 = vmatmul.f32.gmra.mxu0 %v282
        %v363 = vpop.f32.mrf.mxu0
        %v364 = vadd.f32 %v268, %v363
        %365 = vmatmul.f32.gmra.mxu0 %v285
        %v366 = vpop.f32.mrf.mxu0
        %v367 = vadd.f32 %v268, %v366
        %368 = vmatmul.f32.gmra.mxu0 %v288
        %v369 = vpop.f32.mrf.mxu0
        %v370 = vadd.f32 %v268, %v369
        %371 = vmatmul.f32.gmra.mxu0 %v291
        %v372 = vpop.f32.mrf.mxu0
        %v373 = vadd.f32 %v268, %v372
        %374 = vmatmul.f32.gmra.mxu0 %v294
        %v375 = vpop.f32.mrf.mxu0
        %v376 = vadd.f32 %v268, %v375
        %377 = vdwg.mxu0
        %378 = vst [vmem:[%s234] sm:$0xff] %v314
        %379 = vst [vmem:[%s234 + $0x8] sm:$0xff] %v355
        %380 = vst [vmem:[%s234 + $0x10] sm:$0xff] %v317
        %381 = vst [vmem:[%s234 + $0x18] sm:$0xff] %v358
        %382 = vst [vmem:[%s234 + $0x20] sm:$0xff] %v320
        %383 = vst [vmem:[%s234 + $0x28] sm:$0xff] %v361
        %384 = vst [vmem:[%s234 + $0x30] sm:$0xff] %v323
        %385 = vst [vmem:[%s234 + $0x38] sm:$0xff] %v364
        %386 = vst [vmem:[%s234 + $0x40] sm:$0xff] %v326
        %387 = vst [vmem:[%s234 + $0x48] sm:$0xff] %v367
        %388 = vst [vmem:[%s234 + $0x50] sm:$0xff] %v329
        %389 = vst [vmem:[%s234 + $0x58] sm:$0xff] %v370
        %390 = vst [vmem:[%s234 + $0x60] sm:$0xff] %v332
        %391 = vst [vmem:[%s234 + $0x68] sm:$0xff] %v373
        %392 = vst [vmem:[%s234 + $0x70] sm:$0xff] %v335
        %393 = vst [vmem:[%s234 + $0x78] sm:$0xff] %v376
        %s394 = sand.u32 %s120, 1
        %s395 = scalar_lea.sflag [#allocation4], %s394
        %s396 = sand.u32 %s120, 1
        %s397 = smul.addr %s396, 128
        %s398 = scalar_lea.vmem [#allocation5], %s397
        // Predicated region
        $region37: #{tpu_custom_call.1} parent=31 // pred_check
          %p399 = pneg %p130
        $region38: #{tpu_custom_call.1} parent=31 // pred_check_branch
          %401 = sbr.rel (%p399) target = $region40
        $region39: #{tpu_custom_call.1} parent=31 // pred_region
          %s402 = smul.u32 8, %s25
          %s403 = smul.u32 2, %s24
          %405 = vsyncadd %s395, 0
          %s406 = smul.addr %s402, 4
          %s407 = sadd.s32 %s403, %s406
          %s408 = smul.addr %s407, 8
          %s409 = scalar_lea.hbm %s3, %s408
          %s410 = sshll.u32 %s398, 4
          %s411 = int_to_ptr.vmem [resolvable:$true] %s410
          %s412 = sshll.u32 %s409, 4
          %s413 = int_to_ptr.hbm [resolvable:$true] %s412
          %418 = dma.vmem_to_hbm [thread:$0]  %s411, 2048, %s413, %s395, 256, 512, 16
        $region40: #{tpu_custom_call.1} parent=31 // pred_fallthru
          _
      $region32: #{tpu_custom_call.1} parent=5 // pred_fallthru
        _
      %p419 = scmp.le.s32.totalorder 2, %s15
      // Predicated region
      $region41: #{tpu_custom_call.1} parent=5 // pred_check
        %p420 = pneg %p419
      $region42: #{tpu_custom_call.1} parent=5 // pred_check_branch
        %422 = sbr.rel (%p420) target = $region44
      $region43: #{tpu_custom_call.1} parent=5 // pred_region
        %s423 = ssub.s32 %s15, 2
        // Predicated region
        $region45: #{tpu_custom_call.1} parent=43 // pred_check
          %p424 = pneg %p136
        $region46: #{tpu_custom_call.1} parent=43 // pred_check_branch
          %426 = sbr.rel (%p424) target = $region48
        $region47: #{tpu_custom_call.1} parent=43 // pred_region
          %s427 = sand.u32 %s121, 1
          %s428 = scalar_lea.sflag [#allocation4], %s427
          %s429 = sand.u32 %s121, 1
          %s430 = smul.addr %s429, 128
          %s431 = scalar_lea.vmem [#allocation5], %s430
          %433 = dma.done %s428, 2048
        $region48: #{tpu_custom_call.1} parent=43 // pred_fallthru
          _
      $region44: #{tpu_custom_call.1} parent=5 // pred_fallthru
        _
    $region6: #{tpu_custom_call.1} parent=1 // loop_footer
      %s19 = sadd.s32 1, %s15
    $region7: #{tpu_custom_call.1} parent=1 // loop_footer_branch
      %14 = sbr.rel target = $region3
    $region8: #{tpu_custom_call.1} parent=1 // loop_exit
      _
    %434 = vsyncpa [#allocation3], 1
    %s435 = scalar_lea.sflag [#allocation3], 1
    %436 = vsyncpa %s435, 1
    %437 = vsyncpa [#allocation4], 1
    %s438 = scalar_lea.sflag [#allocation4], 1
    %439 = vsyncpa %s438, 1

</llo_original>
